<compile_context>
chip_gen: v5e
topology: v5e:2x2
jax: 0.10.0
libtpu: 0.0.40
codegen_flags: <defaults>
</compile_context>

<pallas_src>
import functools

import jax
import jax.numpy as jnp
from jax.experimental import pallas as pl
from jax.experimental.pallas import tpu as pltpu

LANE = 128       # vreg lane width
SUBLANE = 8      # vreg sublane count (f32)
# Once the (8-row-padded) batch reaches this many rows, split the batch tile so
# the parallel grid has >=2 steps (engages both TensorCores on v7x; costs at
# most one extra ~0.35us grid step on single-TC v5e/v6e).
MIN_ROWS_FOR_SPLIT = 256


def _round_up(n: int, m: int) -> int:
    return ((n + m - 1) // m) * m


def policy_mlp_kernel(x_ref, w1_ref, b1_ref, w2_ref, b2_ref, w3_ref, b3_ref,
                      o_ref):
    """One batch tile of logits = fc3(relu(fc2(relu(fc1(x))))).

    Weights/biases have constant index_maps, so they stay VMEM-resident across
    the batch grid.  Matmul operands may be bf16 (v6e/v7x) but accumulation,
    bias-add and ReLU are always float32.
    """
    # fc1 + ReLU
    h1 = jnp.dot(x_ref[...], w1_ref[...], preferred_element_type=jnp.float32)
    h1 = jnp.maximum(h1 + b1_ref[...], 0.0)

    # fc2 + ReLU (cast is a no-op in the default f32 path)
    h1 = h1.astype(w2_ref.dtype)
    h2 = jnp.dot(h1, w2_ref[...], preferred_element_type=jnp.float32)
    h2 = jnp.maximum(h2 + b2_ref[...], 0.0)

    # fc3 (logits, no activation); narrow (n_actions-wide) store.
    h2 = h2.astype(w3_ref.dtype)
    out = jnp.dot(h2, w3_ref[...], preferred_element_type=jnp.float32)
    o_ref[...] = (out + b3_ref[...]).astype(o_ref.dtype)


@functools.partial(jax.jit, static_argnames=("batch_tile",))
def policy_network_forward(x, params, *, batch_tile=2048):
    """x: (B, input_dims) float32; params: output of `prepare_params`.

    Weights are stored as (in, out) = transpose of PyTorch's (out, in), so the
    kernel computes x @ W + b == F.linear(x, W_pt, b_pt).
    """
    w1, b1 = params["w1"], params["b1"]
    w2, b2 = params["w2"], params["b2"]
    w3, b3 = params["w3"], params["b3"]
    B, in_dim = x.shape
    n_actions = w3.shape[1]

    # --- batch tiling -------------------------------------------------------
    # Big tiles amortize per-grid-step overhead; besides the ~66 KiB of
    # weights, per-tile VMEM is only the (TB, in_dim) input, the
    # (TB, n_actions) output and two (TB, 128) f32 intermediates.
    B_pad8 = _round_up(B, SUBLANE)
    TB = _round_up(min(int(batch_tile), B_pad8), SUBLANE)
    if B_pad8 >= MIN_ROWS_FOR_SPLIT:
        # Keep >=2 grid steps so the "parallel" axis can shard across v7x's
        # two TensorCores.
        TB = min(TB, _round_up(pl.cdiv(B_pad8, 2), SUBLANE))
    B_pad = _round_up(B_pad8, TB)
    if B_pad != B:
        x = jnp.pad(x, ((0, B_pad - B), (0, 0)))
    x = x.astype(w1.dtype)

    grid = (B_pad // TB,)

    # Constant block index -> VMEM-resident across the (parallel) batch grid,
    # no per-tile re-DMA of weights/biases.
    resident = lambda arr: pl.BlockSpec(arr.shape, lambda i: (0, 0))

    out = pl.pallas_call(
        policy_mlp_kernel,
        out_shape=jax.ShapeDtypeStruct((B_pad, n_actions), jnp.float32),
        grid_spec=pltpu.PrefetchScalarGridSpec(
            num_scalar_prefetch=0,
            grid=grid,
            in_specs=[
                pl.BlockSpec((TB, in_dim), lambda i: (i, 0)),   # x batch tile
                resident(w1), resident(b1),
                resident(w2), resident(b2),
                resident(w3), resident(b3),
            ],
            # Output block keeps the true n_actions width (legal: equals the
            # full last dim).  Compared to padding logits to 128 lanes this
            # cuts HBM write bytes 32x, the binding resource at large B.
            out_specs=pl.BlockSpec((TB, n_actions), lambda i: (i, 0)),
        ),
        compiler_params=pltpu.CompilerParams(
            dimension_semantics=("parallel",)),
    )(x, w1, b1, w2, b2, w3, b3)

    # Strip batch padding (no-op when B is already a tile multiple).
    return out[:B]


def prepare_params(params, compute_dtype=jnp.float32):
    """One-time parameter prep — do this at init, NOT per forward call.

    Weights -> matmul-operand dtype (bf16 only pays off on v6e/v7x; keep f32 on
    v5e, which has no bf16 VPU), biases -> f32 row vectors.
    """
    return {
        "w1": params["w1"].astype(compute_dtype),
        "w2": params["w2"].astype(compute_dtype),
        "w3": params["w3"].astype(compute_dtype),
        "b1": params["b1"].reshape(1, -1).astype(jnp.float32),
        "b2": params["b2"].reshape(1, -1).astype(jnp.float32),
        "b3": params["b3"].reshape(1, -1).astype(jnp.float32),
    }


def init_params(key, input_dims, n_actions, hidden=128):
    """Deterministic init mimicking nn.Linear default (uniform +-1/sqrt(fan_in)).
    Weights are stored as (in, out) = transpose of PyTorch's (out, in)."""
    ks = jax.random.split(key, 6)

    def linear(kw, kb, fan_in, fan_out):
        bound = 1.0 / jnp.sqrt(float(fan_in))
        w = jax.random.uniform(kw, (fan_in, fan_out), jnp.float32, -bound, bound)
        b = jax.random.uniform(kb, (1, fan_out), jnp.float32, -bound, bound)
        return w, b

    w1, b1 = linear(ks[0], ks[1], input_dims, hidden)
    w2, b2 = linear(ks[2], ks[3], hidden, hidden)
    w3, b3 = linear(ks[4], ks[5], hidden, n_actions)
    return {"w1": w1, "b1": b1, "w2": w2, "b2": b2, "w3": w3, "b3": b3}


if __name__ == "__main__":
    key = jax.random.PRNGKey(0)
    k_params, k_x1, k_x2 = jax.random.split(key, 3)

    # LunarLander-v2: input_dims = (8,), n_actions = 4.
    input_dims, n_actions = 8, 4
    raw_params = init_params(k_params, input_dims, n_actions)
    params_f32 = prepare_params(raw_params)          # default f32 operands

    def ref_forward(x, p):
        h = jnp.maximum(x @ p["w1"] + p["b1"], 0.0)
        h = jnp.maximum(h @ p["w2"] + p["b2"], 0.0)
        return h @ p["w3"] + p["b3"]

    # --- RL-rollout-sized batch (B=8): single-tile path ----------------------
    x_small = jax.random.normal(k_x1, (8, input_dims), dtype=jnp.float32)
    logits = policy_network_forward(x_small, params_f32)
    jax.block_until_ready(logits)
    ref = ref_forward(x_small, params_f32)
    assert logits.shape == (8, n_actions)
    assert jnp.allclose(logits, ref, atol=1e-5, rtol=1e-5)

    # --- Larger batch (B=272): exercises batch padding + the >=2-grid-step
    # (dual-TC on v7x) path. --------------------------------------------------
    x_big = jax.random.normal(k_x2, (272, input_dims), dtype=jnp.float32)
    logits_big = policy_network_forward(x_big, params_f32)
    jax.block_until_ready(logits_big)
    ref_big = ref_forward(x_big, params_f32)
    assert logits_big.shape == (272, n_actions)
    assert jnp.allclose(logits_big, ref_big, atol=1e-5, rtol=1e-5)

    # --- bf16-operand path (MXU fast path on v6e/v7x; leave f32 on v5e) ------
    params_bf16 = prepare_params(raw_params, compute_dtype=jnp.bfloat16)
    logits_bf16 = policy_network_forward(x_big, params_bf16)
    jax.block_until_ready(logits_bf16)
    assert logits_bf16.shape == (272, n_actions)
    assert jnp.allclose(logits_bf16, ref_big, atol=1e-1, rtol=1e-1)

    # TODO(synk): for the actual RL rollout (B~8 per env step) the whole step is
    # launch-bound; the right fix is a rollout kernel that keeps the weights in
    # VMEM scratch across a fori_loop over env steps and fuses softmax/sampling
    # (masking any padded logit columns to -inf before the softmax) — out of
    # scope for the plain forward pass here.
    print("KERNEL_OK")
</pallas_src>

<mosaic_0001>
module attributes {stable_mosaic.version = 11 : i64} {
  func.func @policy_mlp_kernel(%arg0: i32, %arg1: memref<8x8xf32, #tpu.memory_space<vmem>>, %arg2: memref<8x128xf32, #tpu.memory_space<vmem>>, %arg3: memref<1x128xf32, #tpu.memory_space<vmem>>, %arg4: memref<128x128xf32, #tpu.memory_space<vmem>>, %arg5: memref<1x128xf32, #tpu.memory_space<vmem>>, %arg6: memref<128x4xf32, #tpu.memory_space<vmem>>, %arg7: memref<1x4xf32, #tpu.memory_space<vmem>>, %arg8: memref<8x4xf32, #tpu.memory_space<vmem>>) attributes {dimension_semantics = [#tpu.dimension_semantics<parallel>], iteration_bounds = array<i64: 1>, scalar_prefetch = 0 : i64, scratch_operands = 0 : i64, tpu.core_type = #tpu.core_type<tc>, window_params = [{transform_indices = @transform_0, window_bounds = array<i64: 8, 8>}, {pipeline_mode = #tpu.pipeline_mode<synchronous>, transform_indices = @transform_1, window_bounds = array<i64: 8, 128>}, {pipeline_mode = #tpu.pipeline_mode<synchronous>, transform_indices = @transform_2, window_bounds = array<i64: 1, 128>}, {pipeline_mode = #tpu.pipeline_mode<synchronous>, transform_indices = @transform_3, window_bounds = array<i64: 128, 128>}, {pipeline_mode = #tpu.pipeline_mode<synchronous>, transform_indices = @transform_4, window_bounds = array<i64: 1, 128>}, {pipeline_mode = #tpu.pipeline_mode<synchronous>, transform_indices = @transform_5, window_bounds = array<i64: 128, 4>}, {pipeline_mode = #tpu.pipeline_mode<synchronous>, transform_indices = @transform_6, window_bounds = array<i64: 1, 4>}, {transform_indices = @transform_7, window_bounds = array<i64: 8, 4>}]} {
    %c0 = arith.constant 0 : index
    %c0_0 = arith.constant 0 : index
    %0 = vector.load %arg1[%c0, %c0_0] : memref<8x8xf32, #tpu.memory_space<vmem>>, vector<8x8xf32>
    %c0_1 = arith.constant 0 : index
    %c0_2 = arith.constant 0 : index
    %1 = vector.load %arg2[%c0_1, %c0_2] : memref<8x128xf32, #tpu.memory_space<vmem>>, vector<8x128xf32>
    %cst = arith.constant dense<0.000000e+00> : vector<8x128xf32>
    %2 = tpu.matmul %0, %1, %cst {dimension_numbers = #tpu.dot_dimension_numbers<[1], [0], [0], [1], [0, 0, 1, 1], [], []>} : vector<8x8xf32>, vector<8x128xf32>, vector<8x128xf32> -> vector<8x128xf32>
    %c0_3 = arith.constant 0 : index
    %c0_4 = arith.constant 0 : index
    %3 = vector.load %arg3[%c0_3, %c0_4] : memref<1x128xf32, #tpu.memory_space<vmem>>, vector<1x128xf32>
    %4 = vector.broadcast %3 : vector<1x128xf32> to vector<8x128xf32>
    %5 = arith.addf %2, %4 : vector<8x128xf32>
    %cst_5 = arith.constant 0.000000e+00 : f32
    %6 = vector.broadcast %cst_5 : f32 to vector<8x128xf32>
    %7 = arith.maximumf %5, %6 : vector<8x128xf32>
    %c0_6 = arith.constant 0 : index
    %c0_7 = arith.constant 0 : index
    %8 = vector.load %arg4[%c0_6, %c0_7] : memref<128x128xf32, #tpu.memory_space<vmem>>, vector<128x128xf32>
    %cst_8 = arith.constant dense<0.000000e+00> : vector<8x128xf32>
    %9 = tpu.matmul %7, %8, %cst_8 {dimension_numbers = #tpu.dot_dimension_numbers<[1], [0], [0], [1], [0, 0, 1, 1], [], []>} : vector<8x128xf32>, vector<128x128xf32>, vector<8x128xf32> -> vector<8x128xf32>
    %c0_9 = arith.constant 0 : index
    %c0_10 = arith.constant 0 : index
    %10 = vector.load %arg5[%c0_9, %c0_10] : memref<1x128xf32, #tpu.memory_space<vmem>>, vector<1x128xf32>
    %11 = vector.broadcast %10 : vector<1x128xf32> to vector<8x128xf32>
    %12 = arith.addf %9, %11 : vector<8x128xf32>
    %cst_11 = arith.constant 0.000000e+00 : f32
    %13 = vector.broadcast %cst_11 : f32 to vector<8x128xf32>
    %14 = arith.maximumf %12, %13 : vector<8x128xf32>
    %c0_12 = arith.constant 0 : index
    %c0_13 = arith.constant 0 : index
    %15 = vector.load %arg6[%c0_12, %c0_13] : memref<128x4xf32, #tpu.memory_space<vmem>>, vector<128x4xf32>
    %cst_14 = arith.constant dense<0.000000e+00> : vector<8x4xf32>
    %16 = tpu.matmul %14, %15, %cst_14 {dimension_numbers = #tpu.dot_dimension_numbers<[1], [0], [0], [1], [0, 0, 1, 1], [], []>} : vector<8x128xf32>, vector<128x4xf32>, vector<8x4xf32> -> vector<8x4xf32>
    %c0_15 = arith.constant 0 : index
    %c0_16 = arith.constant 0 : index
    %17 = vector.load %arg7[%c0_15, %c0_16] : memref<1x4xf32, #tpu.memory_space<vmem>>, vector<1x4xf32>
    %18 = vector.broadcast %17 : vector<1x4xf32> to vector<8x4xf32>
    %19 = arith.addf %16, %18 : vector<8x4xf32>
    %c0_17 = arith.constant 0 : index
    %c0_18 = arith.constant 0 : index
    %20 = vector.load %arg8[%c0_17, %c0_18] : memref<8x4xf32, #tpu.memory_space<vmem>>, vector<8x4xf32>
    tpu.vector_store %arg8[%c0_17, %c0_18], %19 {strides = array<i32>} : memref<8x4xf32, #tpu.memory_space<vmem>>, vector<8x4xf32>,
    return
  }
  func.func @transform_0(%arg0: i32) -> (i32, i32) {
    %c0_i32 = arith.constant 0 : i32
    %c0_i32_0 = arith.constant 0 : i32
    return %arg0, %c0_i32 : i32, i32
  }
  func.func @transform_1(%arg0: i32) -> (i32, i32) {
    %c0_i32 = arith.constant 0 : i32
    %c0_i32_0 = arith.constant 0 : i32
    %c0_i32_1 = arith.constant 0 : i32
    return %c0_i32, %c0_i32_0 : i32, i32
  }
  func.func @transform_2(%arg0: i32) -> (i32, i32) {
    %c0_i32 = arith.constant 0 : i32
    %c0_i32_0 = arith.constant 0 : i32
    %c0_i32_1 = arith.constant 0 : i32
    return %c0_i32, %c0_i32_0 : i32, i32
  }
  func.func @transform_3(%arg0: i32) -> (i32, i32) {
    %c0_i32 = arith.constant 0 : i32
    %c0_i32_0 = arith.constant 0 : i32
    %c0_i32_1 = arith.constant 0 : i32
    return %c0_i32, %c0_i32_0 : i32, i32
  }
  func.func @transform_4(%arg0: i32) -> (i32, i32) {
    %c0_i32 = arith.constant 0 : i32
    %c0_i32_0 = arith.constant 0 : i32
    %c0_i32_1 = arith.constant 0 : i32
    return %c0_i32, %c0_i32_0 : i32, i32
  }
  func.func @transform_5(%arg0: i32) -> (i32, i32) {
    %c0_i32 = arith.constant 0 : i32
    %c0_i32_0 = arith.constant 0 : i32
    %c0_i32_1 = arith.constant 0 : i32
    return %c0_i32, %c0_i32_0 : i32, i32
  }
  func.func @transform_6(%arg0: i32) -> (i32, i32) {
    %c0_i32 = arith.constant 0 : i32
    %c0_i32_0 = arith.constant 0 : i32
    %c0_i32_1 = arith.constant 0 : i32
    return %c0_i32, %c0_i32_0 : i32, i32
  }
  func.func @transform_7(%arg0: i32) -> (i32, i32) {
    %c0_i32 = arith.constant 0 : i32
    %c0_i32_0 = arith.constant 0 : i32
    return %arg0, %c0_i32 : i32, i32
  }
}

</mosaic_0001>

<llo_original>
// kernel: policy_network_forward.1
$region0: #{policy_network_forward.1}
  #allocation0 [shape = 'u32[]', space=smem, size = 0x4, offset = 0x4, fixed_abs, tag = 'smem constant byte address 0x4 - core index']
  #allocation1 [shape = 'u32[72,128]{1,0:T(1,128)}', space=vmem, size = 0x9000, scoped, tag = 'internal scratch']
  %s0 = inlined_call_operand.hbm [shape: f32[8,8], index: 0, kind: input, shape index: {}]
  %s1 = inlined_call_operand.hbm [shape: f32[8,128], index: 1, kind: input, shape index: {}]
  %s2 = inlined_call_operand.vmem [shape: f32[1,128], index: 2, kind: input, shape index: {}]
  %s3 = inlined_call_operand.vmem [shape: f32[128,128], index: 3, kind: input, shape index: {}]
  %s4 = inlined_call_operand.vmem [shape: f32[1,128], index: 4, kind: input, shape index: {}]
  %s5 = inlined_call_operand.vmem [shape: f32[128,4], index: 5, kind: input, shape index: {}]
  %s6 = inlined_call_operand.vmem [shape: f32[1,4], index: 6, kind: input, shape index: {}]
  %s7 = inlined_call_operand.vmem [shape: f32[8,4], index: 7, kind: output, shape index: {}]
  %s8 = sld [smem:[#allocation0]]
  $region46: #{policy_network_forward.1} parent=0
    _
  %s10 = ssub.s32 1, %s8
  %s11 = scalar_select 0, %s10, %s8
  $region1: #{policy_network_forward.1} parent=0
    #allocation2 [shape = 'u8[4096]{0}', space=vmem, size = 0x1000, scoped, tag = 'input window, operand 0, single buffered']
    #allocation3 [shape = 's32[1]{0}', space=sflag, size = 0x4, scoped, tag = 'scoped memory for policy_network_forward.1']
    #allocation4 [shape = 'u8[4096]{0}', space=vmem, size = 0x1000, scoped, tag = 'input window, operand 1, single buffered']
    #allocation5 [shape = 's32[1]{0}', space=sflag, size = 0x4, scoped, tag = 'scoped memory for policy_network_forward.1']
    %12 = vsyncpa [#allocation3], 0
    %13 = vsyncpa [#allocation5], 0
    // Predicated region
    $region2: #{policy_network_forward.1} parent=1 // pred_check
      _
    $region3: #{policy_network_forward.1} parent=1 // pred_check_branch
      %15 = sbr.rel (0) target = $region5
    $region4: #{policy_network_forward.1} parent=1 // pred_region
      %17 = vsyncadd [#allocation3], 0
      %s19 = sshll.u32 %s0, 4
      %s20 = int_to_ptr.hbm [resolvable:$true] %s19
      %s21 = sshll.u32 [#allocation2], 4
      %s22 = int_to_ptr.vmem [resolvable:$true] %s21
      %24 = dma.hbm_to_vmem [thread:$0]  %s20, 128, %s22, [#allocation3]
    $region5: #{policy_network_forward.1} parent=1 // pred_fallthru
      _
    // Predicated region
    $region6: #{policy_network_forward.1} parent=1 // pred_check
      _
    $region7: #{policy_network_forward.1} parent=1 // pred_check_branch
      %26 = sbr.rel (0) target = $region9
    $region8: #{policy_network_forward.1} parent=1 // pred_region
      %28 = vsyncadd [#allocation5], 0
      %s30 = sshll.u32 %s1, 4
      %s31 = int_to_ptr.hbm [resolvable:$true] %s30
      %s32 = sshll.u32 [#allocation4], 4
      %s33 = int_to_ptr.vmem [resolvable:$true] %s32
      %35 = dma.hbm_to_vmem [thread:$0]  %s31, 128, %s33, [#allocation5]
    $region9: #{policy_network_forward.1} parent=1 // pred_fallthru
      _
    // Predicated region
    $region10: #{policy_network_forward.1} parent=1 // pred_check
      _
    $region11: #{policy_network_forward.1} parent=1 // pred_check_branch
      %37 = sbr.rel (0) target = $region13
    $region12: #{policy_network_forward.1} parent=1 // pred_region
      _
    $region13: #{policy_network_forward.1} parent=1 // pred_fallthru
      _
    // Predicated region
    $region14: #{policy_network_forward.1} parent=1 // pred_check
      _
    $region15: #{policy_network_forward.1} parent=1 // pred_check_branch
      %39 = sbr.rel (0) target = $region17
    $region16: #{policy_network_forward.1} parent=1 // pred_region
      _
    $region17: #{policy_network_forward.1} parent=1 // pred_fallthru
      _
    // Predicated region
    $region18: #{policy_network_forward.1} parent=1 // pred_check
      _
    $region19: #{policy_network_forward.1} parent=1 // pred_check_branch
      %41 = sbr.rel (0) target = $region21
    $region20: #{policy_network_forward.1} parent=1 // pred_region
      _
    $region21: #{policy_network_forward.1} parent=1 // pred_fallthru
      _
    // Predicated region
    $region22: #{policy_network_forward.1} parent=1 // pred_check
      _
    $region23: #{policy_network_forward.1} parent=1 // pred_check_branch
      %43 = sbr.rel (0) target = $region25
    $region24: #{policy_network_forward.1} parent=1 // pred_region
      _
    $region25: #{policy_network_forward.1} parent=1 // pred_fallthru
      _
    // Predicated region
    $region26: #{policy_network_forward.1} parent=1 // pred_check
      _
    $region27: #{policy_network_forward.1} parent=1 // pred_check_branch
      %45 = sbr.rel (0) target = $region29
    $region28: #{policy_network_forward.1} parent=1 // pred_region
      _
    $region29: #{policy_network_forward.1} parent=1 // pred_fallthru
      _
    // Predicated region
    $region30: #{policy_network_forward.1} parent=1 // pred_check
      _
    $region31: #{policy_network_forward.1} parent=1 // pred_check_branch
      %47 = sbr.rel (0) target = $region33
    $region32: #{policy_network_forward.1} parent=1 // pred_region
      %49 = dma.done [#allocation3], 128
    $region33: #{policy_network_forward.1} parent=1 // pred_fallthru
      _
    // Predicated region
    $region34: #{policy_network_forward.1} parent=1 // pred_check
      _
    $region35: #{policy_network_forward.1} parent=1 // pred_check_branch
      %51 = sbr.rel (0) target = $region37
    $region36: #{policy_network_forward.1} parent=1 // pred_region
      %53 = dma.done [#allocation5], 128
    $region37: #{policy_network_forward.1} parent=1 // pred_fallthru
      _
    %v54 = vld [vmem:[#allocation2] sm:$0xff]
    %v55 = vld [vmem:[#allocation4] sm:$0xff]
    %v56 = vld [vmem:[%s2] sm:$0x1]
    %v58 = vperm.slane %v56, 0
    %vm60 = vcmask 64512
    %v62 = vsel %vm60, %v54, 0
    %64 = vmatpush.msra.mxu0 0.0
    %65 = vmatpush.msra.mxu0 0.0
    %66 = vmatpush.msra.mxu0 0.0
    %67 = vmatpush.msra.mxu0 0.0
    %68 = vmatpush.msra.mxu0 0.0
    %69 = vmatpush.msra.mxu0 0.0
    %70 = vmatpush.msra.mxu0 0.0
    %71 = vmatpush.msra.mxu0 0.0
    %72 = vmatpush.msra.mxu0 0.0
    %73 = vmatpush.msra.mxu0 0.0
    %74 = vmatpush.msra.mxu0 0.0
    %75 = vmatpush.msra.mxu0 0.0
    %76 = vmatpush.msra.mxu0 0.0
    %77 = vmatpush.msra.mxu0 0.0
    %78 = vmatpush.msra.mxu0 0.0
    %79 = vmatpush.msra.mxu0 %v55
    %80 = vmatmul.f32.gmra.mxu0 %v62
    %v81 = vpop.f32.mrf.mxu0
    %v82 = vadd.f32 %v58, %v81
    %83 = vdwg.mxu0
    %v84 = vmax.f32 %v82, 0.0
    %v85 = vld [vmem:[%s3] sm:$0xff]
    %v86 = vld [vmem:[%s3 + $0x8] sm:$0xff]
    %v87 = vld [vmem:[%s3 + $0x10] sm:$0xff]
    %v88 = vld [vmem:[%s3 + $0x18] sm:$0xff]
    %v89 = vld [vmem:[%s3 + $0x20] sm:$0xff]
    %v90 = vld [vmem:[%s3 + $0x28] sm:$0xff]
    %v91 = vld [vmem:[%s3 + $0x30] sm:$0xff]
    %v92 = vld [vmem:[%s3 + $0x38] sm:$0xff]
    %v93 = vld [vmem:[%s3 + $0x40] sm:$0xff]
    %v94 = vld [vmem:[%s3 + $0x48] sm:$0xff]
    %v95 = vld [vmem:[%s3 + $0x50] sm:$0xff]
    %v96 = vld [vmem:[%s3 + $0x58] sm:$0xff]
    %v97 = vld [vmem:[%s3 + $0x60] sm:$0xff]
    %v98 = vld [vmem:[%s3 + $0x68] sm:$0xff]
    %v99 = vld [vmem:[%s3 + $0x70] sm:$0xff]
    %v100 = vld [vmem:[%s3 + $0x78] sm:$0xff]
    %v101 = vld [vmem:[%s4] sm:$0x1]
    %v103 = vperm.slane %v101, 0
    %105 = vmatpush.msra.mxu0 %v100
    %106 = vmatpush.msra.mxu0 %v99
    %107 = vmatpush.msra.mxu0 %v98
    %108 = vmatpush.msra.mxu0 %v97
    %109 = vmatpush.msra.mxu0 %v96
    %110 = vmatpush.msra.mxu0 %v95
    %111 = vmatpush.msra.mxu0 %v94
    %112 = vmatpush.msra.mxu0 %v93
    %113 = vmatpush.msra.mxu0 %v92
    %114 = vmatpush.msra.mxu0 %v91
    %115 = vmatpush.msra.mxu0 %v90
    %116 = vmatpush.msra.mxu0 %v89
    %117 = vmatpush.msra.mxu0 %v88
    %118 = vmatpush.msra.mxu0 %v87
    %119 = vmatpush.msra.mxu0 %v86
    %120 = vmatpush.msra.mxu0 %v85
    %121 = vmatmul.f32.gmra.mxu0 %v84
    %v122 = vpop.f32.mrf.mxu0
    %v123 = vadd.f32 %v103, %v122
    %124 = vdwg.mxu0
    %v125 = vmax.f32 %v123, 0.0
    %v126 = vld [vmem:[%s5] sm:$0xff]
    %v127 = vld [vmem:[%s5 + $0x8] sm:$0xff]
    %v128 = vld [vmem:[%s5 + $0x10] sm:$0xff]
    %v129 = vld [vmem:[%s5 + $0x18] sm:$0xff]
    %v130 = vld [vmem:[%s5 + $0x20] sm:$0xff]
    %v131 = vld [vmem:[%s5 + $0x28] sm:$0xff]
    %v132 = vld [vmem:[%s5 + $0x30] sm:$0xff]
    %v133 = vld [vmem:[%s5 + $0x38] sm:$0xff]
    %v134 = vld [vmem:[%s5 + $0x40] sm:$0xff]
    %v135 = vld [vmem:[%s5 + $0x48] sm:$0xff]
    %v136 = vld [vmem:[%s5 + $0x50] sm:$0xff]
    %v137 = vld [vmem:[%s5 + $0x58] sm:$0xff]
    %v138 = vld [vmem:[%s5 + $0x60] sm:$0xff]
    %v139 = vld [vmem:[%s5 + $0x68] sm:$0xff]
    %v140 = vld [vmem:[%s5 + $0x70] sm:$0xff]
    %v141 = vld [vmem:[%s5 + $0x78] sm:$0xff]
    %v142 = vld [vmem:[%s6] sm:$0x1]
    %v144 = vperm.slane %v142, 0
    %146 = vmatpush.msra.mxu0 %v141
    %147 = vmatpush.msra.mxu0 %v140
    %148 = vmatpush.msra.mxu0 %v139
    %149 = vmatpush.msra.mxu0 %v138
    %150 = vmatpush.msra.mxu0 %v137
    %151 = vmatpush.msra.mxu0 %v136
    %152 = vmatpush.msra.mxu0 %v135
    %153 = vmatpush.msra.mxu0 %v134
    %154 = vmatpush.msra.mxu0 %v133
    %155 = vmatpush.msra.mxu0 %v132
    %156 = vmatpush.msra.mxu0 %v131
    %157 = vmatpush.msra.mxu0 %v130
    %158 = vmatpush.msra.mxu0 %v129
    %159 = vmatpush.msra.mxu0 %v128
    %160 = vmatpush.msra.mxu0 %v127
    %161 = vmatpush.msra.mxu0 %v126
    %162 = vmatmul.f32.gmra.mxu0 %v125
    %v163 = vpop.f32.mrf.mxu0
    %v164 = vadd.f32 %v144, %v163
    %165 = vdwg.mxu0
    %vm166 = vcmask 31744
    %167 = vst.msk [vmem:[%s7] sm:$0xff] %vm166, %v164
    // Predicated region
    $region38: #{policy_network_forward.1} parent=1 // pred_check
      _
    $region39: #{policy_network_forward.1} parent=1 // pred_check_branch
      %169 = sbr.rel (0) target = $region41
    $region40: #{policy_network_forward.1} parent=1 // pred_region
      _
    $region41: #{policy_network_forward.1} parent=1 // pred_fallthru
      _
    // Predicated region
    $region42: #{policy_network_forward.1} parent=1 // pred_check
      _
    $region43: #{policy_network_forward.1} parent=1 // pred_check_branch
      %171 = sbr.rel (0) target = $region45
    $region44: #{policy_network_forward.1} parent=1 // pred_region
      _
    $region45: #{policy_network_forward.1} parent=1 // pred_fallthru
      _
    %172 = vsyncpa [#allocation3], 1
    %173 = vsyncpa [#allocation5], 1

</llo_original>
